<compile_context>
chip_gen: v7x
topology: tpu7x:2x2x1
jax: 0.10.0
libtpu: 0.0.40
codegen_flags: <defaults>
</compile_context>

<pallas_src>
import jax
import jax.numpy as jnp
from jax.experimental import pallas as pl
from jax.experimental.pallas import tpu as pltpu


_NEG_BIG = -1e30                        # padded-class bias: never wins max, exp -> 0
_TILE_BUDGET_BYTES = 36 * 1024 * 1024   # conservative per-core VMEM budget (v7x: 64 MiB/TC)
_VMEM_LIMIT_BYTES = 48 * 1024 * 1024    # scoped VMEM limit, safe on v5e / v6e / v7x


def _round_up(x, m):
    return ((x + m - 1) // m) * m


def _choose_class_tile(n_classes, dim, n_rows_hint=1024):
    """Lane-aligned class-tile width under a generation-safe VMEM budget."""
    if n_classes <= 1024:
        return _round_up(n_classes, 128)          # single tile, lane-aligned
    for tc in (2048, 1024, 512, 256):
        need = (2 * dim * tc * 2                  # W double-buffer (bf16)
                + 2 * tc * 4 * 2                  # bias double-buffer (f32)
                + 3 * n_rows_hint * tc * 4        # (2N, tc) f32 logits/exp temps
                + n_rows_hint * dim * 2)          # resident x (bf16)
        if need <= _TILE_BUDGET_BYTES:
            return tc
    return 256


def prepare_softmaxproto_params(fc_w, fc_b, *, tile_classes=None, split=2):
    """ONE-TIME parameter preparation (do at init / after optimizer steps, NOT
    per forward call): cast W to bf16, pad the class dim, and pre-tile to a
    contiguous (num_tiles, D, tc) layout so every streamed tile is one
    contiguous DMA.  Bias is padded with -1e30 and kept f32 end-to-end."""
    dim, n_classes = fc_w.shape
    tc = _round_up(int(tile_classes), 128) if tile_classes else \
        _choose_class_tile(n_classes, dim)
    n_tiles = pl.cdiv(n_classes, tc)
    n_split = split if n_tiles >= 2 else 1
    n_tiles = _round_up(n_tiles, n_split)
    c_pad = n_tiles * tc

    w = fc_w.astype(jnp.bfloat16)
    b = fc_b.astype(jnp.float32).reshape(1, n_classes)
    if c_pad != n_classes:
        w = jnp.pad(w, ((0, 0), (0, c_pad - n_classes)))
        b = jnp.pad(b, ((0, 0), (0, c_pad - n_classes)), constant_values=_NEG_BIG)
    w_tiles = jnp.transpose(w.reshape(dim, n_tiles, tc), (1, 0, 2))   # (T, D, tc)
    b_tiles = jnp.transpose(b.reshape(1, n_tiles, tc), (1, 0, 2))     # (T, 1, tc)
    return w_tiles, b_tiles


def _softmaxproto_kernel(x_ref, lab_ref, w_ref, b_ref, apwb_ref,
                         m_ref, s_ref, t_ref, ap_ref):
    """Fused SoftmaxPrototypical loss.

    Grid: (n_split "parallel", tiles_per_core "arbitrary").
      x_ref   : (2N, D) bf16, resident.  Rows [0:N]=utterance 0, [N:2N]=utterance 1.
      lab_ref : (2N, 1) int32, resident.
      w_ref   : (D, tc) bf16, streamed contiguous class tile.
      b_ref   : (1, tc) f32,  streamed class tile (padded classes: -1e30).
      apwb_ref: (2,)    f32 in SMEM: (angleproto w, angleproto b).
      m_ref/s_ref/t_ref : (2N, 1) f32 per-core outputs used as resident
                          accumulators (running max / sum(exp) / label logit).
      ap_ref  : (1, 1)  f32 angleproto loss (written by core 0 only).
    """
    p = pl.program_id(0)
    c = pl.program_id(1)
    tiles_per_core = pl.num_programs(1)
    n_rows = x_ref.shape[0]
    n_spk = n_rows // 2
    tc = w_ref.shape[1]

    # --------------- first class tile of this core: init accumulators ---------------
    @pl.when(c == 0)
    def _init():
        m_ref[...] = jnp.full(m_ref.shape, -jnp.inf, m_ref.dtype)
        s_ref[...] = jnp.zeros(s_ref.shape, s_ref.dtype)
        t_ref[...] = jnp.zeros(t_ref.shape, t_ref.dtype)

    # --------------- angleproto branch: once, on core 0, overlapped with W DMA ------
    @pl.when(jnp.logical_and(p == 0, c == 0))
    def _angleproto():
        # anchor = mean(x[:, 1:, :], 1) == x[:, 1, :] for M=2 utterances.
        pos = x_ref[:n_spk, :].astype(jnp.float32)            # (N, D) utterance 0
        anc = x_ref[n_spk:, :].astype(jnp.float32)            # (N, D) utterance 1
        inv_p = jax.lax.rsqrt(
            jnp.maximum(jnp.sum(pos * pos, axis=-1, keepdims=True), 1e-16))
        inv_a = jax.lax.rsqrt(
            jnp.maximum(jnp.sum(anc * anc, axis=-1, keepdims=True), 1e-16))
        # Rows normalised before the dot -> the MXU result *is* the cosine matrix.
        # bf16 MXU feed (f32 accumulation) avoids the multi-pass f32 matmul.
        cos = jax.lax.dot_general((pos * inv_p).astype(jnp.bfloat16),
                                  (anc * inv_a).astype(jnp.bfloat16),
                                  (((1,), (1,)), ((), ())),
                                  preferred_element_type=jnp.float32)   # (N, N)
        # NOTE: torch.clamp(self.w, 1e-6) in the reference is out-of-place => no-op.
        logits_ap = cos * apwb_ref[0] + apwb_ref[1]
        row = jax.lax.broadcasted_iota(jnp.int32, logits_ap.shape, 0)
        col = jax.lax.broadcasted_iota(jnp.int32, logits_ap.shape, 1)
        mx = jnp.max(logits_ap, axis=-1, keepdims=True)
        lse = mx + jnp.log(jnp.sum(jnp.exp(logits_ap - mx), axis=-1, keepdims=True))
        diag = jnp.sum(jnp.where(row == col, logits_ap, 0.0), axis=-1, keepdims=True)
        ap_ref[...] = jnp.sum(lse - diag, keepdims=True) / n_spk

    @pl.when(jnp.logical_and(p != 0, c == 0))
    def _zero_ap():
        ap_ref[...] = jnp.zeros_like(ap_ref)

    # --------------- softmax-CE: one streamed class tile (online logsumexp) ---------
    tile_base = (p * tiles_per_core + c) * tc                 # scalar offset of this tile
    logits = jnp.dot(x_ref[...], w_ref[...],
                     preferred_element_type=jnp.float32) + b_ref[...]   # (2N, tc) f32

    # (1, tc) lane iota vs (label - tile_base): no full (2N, tc) iota / add passes.
    lane = jax.lax.broadcasted_iota(jnp.int32, (1, tc), 1)
    hit = lane == (lab_ref[...] - tile_base)                              # (2N, tc)
    t_ref[...] += jnp.sum(jnp.where(hit, logits, 0.0), axis=-1, keepdims=True)

    tile_max = jnp.max(logits, axis=-1, keepdims=True)
    m_new = jnp.maximum(m_ref[...], tile_max)
    s_ref[...] = (s_ref[...] * jnp.exp(m_ref[...] - m_new)
                  + jnp.sum(jnp.exp(logits - m_new), axis=-1, keepdims=True))
    m_ref[...] = m_new


def softmaxproto_forward(x, label, w_tiles, b_tiles, ap_w, ap_b):
    """Forward of the SoftmaxPrototypical loss.  Returns (nlossS + nlossP, prec1).
    `w_tiles` / `b_tiles` come from `prepare_softmaxproto_params` (one-time)."""
    n_spk, n_utt, dim = x.shape
    assert n_utt == 2
    n_rows = 2 * n_spk
    n_tiles_total, dim_w, tc = w_tiles.shape
    assert dim_w == dim
    # 2-way class-range split (maps to the two v7x TensorCores; runs serially on
    # single-TC v5e/v6e with no extra HBM traffic).
    n_split = 2 if (n_tiles_total >= 2 and n_tiles_total % 2 == 0) else 1
    tiles_per_core = n_tiles_total // n_split

    # Grouped layout: rows [0:N] = utterance 0, rows [N:2N] = utterance 1.  CE loss
    # and accuracy are row-permutation invariant, so tiling the labels equals
    # torch's repeat_interleave on the interleaved flatten.
    x_grp = jnp.transpose(x, (1, 0, 2)).reshape(n_rows, dim).astype(jnp.bfloat16)
    labels2 = jnp.concatenate([label, label]).astype(jnp.int32).reshape(n_rows, 1)
    ap_wb = jnp.stack([jnp.asarray(ap_w, jnp.float32),
                       jnp.asarray(ap_b, jnp.float32)])

    grid_spec = pltpu.PrefetchScalarGridSpec(
        num_scalar_prefetch=0,
        grid=(n_split, tiles_per_core),
        in_specs=[
            pl.BlockSpec((n_rows, dim), lambda p, c: (0, 0)),      # x, resident
            pl.BlockSpec((n_rows, 1), lambda p, c: (0, 0)),        # labels, resident
            pl.BlockSpec((None, dim, tc),                          # W tile (contiguous)
                         lambda p, c: (p * tiles_per_core + c, 0, 0)),
            pl.BlockSpec((None, 1, tc),                            # bias tile
                         lambda p, c: (p * tiles_per_core + c, 0, 0)),
            pl.BlockSpec(memory_space=pltpu.MemorySpace.SMEM),     # angleproto (w, b)
        ],
        out_specs=(
            pl.BlockSpec((None, n_rows, 1), lambda p, c: (p, 0, 0)),   # running max
            pl.BlockSpec((None, n_rows, 1), lambda p, c: (p, 0, 0)),   # running sum(exp)
            pl.BlockSpec((None, n_rows, 1), lambda p, c: (p, 0, 0)),   # label logit
            pl.BlockSpec((None, 1, 1), lambda p, c: (p, 0, 0)),        # angleproto loss
        ),
    )

    m_out, s_out, t_out, ap_out = pl.pallas_call(
        _softmaxproto_kernel,
        out_shape=(jax.ShapeDtypeStruct((n_split, n_rows, 1), jnp.float32),
                   jax.ShapeDtypeStruct((n_split, n_rows, 1), jnp.float32),
                   jax.ShapeDtypeStruct((n_split, n_rows, 1), jnp.float32),
                   jax.ShapeDtypeStruct((n_split, 1, 1), jnp.float32)),
        grid_spec=grid_spec,
        compiler_params=pltpu.CompilerParams(
            dimension_semantics=("parallel", "arbitrary"),   # cores x class reduction
            vmem_limit_bytes=_VMEM_LIMIT_BYTES,
        ),
    )(x_grp, labels2, w_tiles, b_tiles, ap_wb)

    # Trivial XLA epilogue: merge the per-core partial online-LSE stats.
    m = jnp.max(m_out, axis=0)                                   # (2N, 1)
    s = jnp.sum(s_out * jnp.exp(m_out - m[None]), axis=0)        # (2N, 1)
    t = jnp.sum(t_out, axis=0)                                   # (2N, 1) label logit
    lse = m + jnp.log(s)
    loss_s = jnp.mean(lse - t)
    # Top-1 precision in %: label logit equals the global running max => argmax hit
    # (ties counted as correct; negligible for float inputs).
    prec1 = jnp.mean((t >= m).astype(jnp.float32)) * 100.0
    return loss_s + jnp.sum(ap_out), prec1


def softmaxproto_loss(x, label, fc_w, fc_b, ap_w, ap_b):
    """Convenience end-to-end wrapper mirroring the torch module.  For training
    loops, call prepare_softmaxproto_params ONCE and reuse its outputs."""
    w_tiles, b_tiles = prepare_softmaxproto_params(fc_w, fc_b)
    return softmaxproto_forward(x, label, w_tiles, b_tiles, ap_w, ap_b)


# ------------------------------------------------------------------------------
# Pure-JAX reference (mirrors the torch module) for validation
# ------------------------------------------------------------------------------
def _reference(x, label, fc_w, fc_b, ap_w, ap_b):
    def lse(a):
        m = jnp.max(a, axis=-1)
        return m + jnp.log(jnp.sum(jnp.exp(a - m[..., None]), axis=-1))

    n_spk, _, dim = x.shape
    xf = x.reshape(-1, dim)
    lab2 = jnp.repeat(label, 2)
    logits = xf @ fc_w + fc_b
    true = jnp.take_along_axis(logits, lab2[:, None], axis=-1)[:, 0]
    nloss_s = jnp.mean(lse(logits) - true)
    prec1 = jnp.mean((jnp.argmax(logits, axis=-1) == lab2).astype(jnp.float32)) * 100.0

    pos = x[:, 0, :]
    anc = jnp.mean(x[:, 1:, :], axis=1)
    pos_n = pos / jnp.maximum(jnp.linalg.norm(pos, axis=-1, keepdims=True), 1e-8)
    anc_n = anc / jnp.maximum(jnp.linalg.norm(anc, axis=-1, keepdims=True), 1e-8)
    lp = (pos_n @ anc_n.T) * ap_w + ap_b
    nloss_p = jnp.mean(lse(lp) - jnp.diag(lp))
    return nloss_s + nloss_p, prec1


if __name__ == "__main__":
    import numpy as np

    fwd = jax.jit(softmaxproto_forward)

    def run_case(case, n_spk, dim, n_classes, tile_classes=None):
        key = jax.random.fold_in(jax.random.PRNGKey(0), case)
        kx, kl, kw, kb = jax.random.split(key, 4)
        x = jax.random.normal(kx, (n_spk, 2, dim), dtype=jnp.float32)
        label = jax.random.randint(kl, (n_spk,), 0, n_classes, dtype=jnp.int32)
        bound = 1.0 / (dim ** 0.5)          # nn.Linear-style init
        fc_w = jax.random.uniform(kw, (dim, n_classes), jnp.float32, -bound, bound)
        fc_b = jax.random.uniform(kb, (n_classes,), jnp.float32, -bound, bound)
        ap_w = jnp.float32(10.0)            # angleproto init_w
        ap_b = jnp.float32(-5.0)            # angleproto init_b

        # One-time parameter prep (no per-call cast / pad of W on the hot path).
        w_tiles, b_tiles = prepare_softmaxproto_params(
            fc_w, fc_b, tile_classes=tile_classes)
        w_tiles, b_tiles = jax.block_until_ready((w_tiles, b_tiles))

        loss, prec = fwd(x, label, w_tiles, b_tiles, ap_w, ap_b)
        jax.block_until_ready((loss, prec))

        # Reference on bf16-rounded inputs (the kernel feeds the MXU in bf16).
        x_r = x.astype(jnp.bfloat16).astype(jnp.float32)
        w_r = fc_w.astype(jnp.bfloat16).astype(jnp.float32)
        ref_loss, ref_prec = _reference(x_r, label, w_r, fc_b, ap_w, ap_b)
        np.testing.assert_allclose(float(loss), float(ref_loss), rtol=2e-2, atol=5e-2)
        np.testing.assert_allclose(float(prec), float(ref_prec), atol=1.0)

    # small, module-consistent shapes: 8 speakers x 2 utterances, nOut=32, 16 classes
    run_case(0, n_spk=8, dim=32, n_classes=16)
    # exercises the streamed multi-tile online-LSE path with the 2-way class split
    # and a ragged (padded) last tile: C=1300 tiled 6 x 256 -> 2 cores x 3 tiles.
    run_case(1, n_spk=16, dim=64, n_classes=1300, tile_classes=256)

    print("KERNEL_OK")
</pallas_src>

<mosaic_0001>
module attributes {stable_mosaic.version = 11 : i64} {
  func.func @_softmaxproto_kernel(%arg0: i32, %arg1: i32, %arg2: memref<16x32xbf16, #tpu.memory_space<vmem>>, %arg3: memref<16x1xi32, #tpu.memory_space<vmem>>, %arg4: memref<1x32x128xbf16, #tpu.memory_space<vmem>>, %arg5: memref<1x1x128xf32, #tpu.memory_space<vmem>>, %arg6: memref<2xf32, #tpu.memory_space<smem>>, %arg7: memref<1x16x1xf32, #tpu.memory_space<vmem>>, %arg8: memref<1x16x1xf32, #tpu.memory_space<vmem>>, %arg9: memref<1x16x1xf32, #tpu.memory_space<vmem>>, %arg10: memref<1x1x1xf32, #tpu.memory_space<vmem>>) attributes {dimension_semantics = [#tpu.dimension_semantics<parallel>, #tpu.dimension_semantics<arbitrary>], iteration_bounds = array<i64: 1, 1>, scalar_prefetch = 0 : i64, scratch_operands = 0 : i64, tpu.core_type = #tpu.core_type<tc>, window_params = [{pipeline_mode = #tpu.pipeline_mode<synchronous>, transform_indices = @transform_0, window_bounds = array<i64: 16, 32>}, {pipeline_mode = #tpu.pipeline_mode<synchronous>, transform_indices = @transform_1, window_bounds = array<i64: 16, 1>}, {transform_indices = @transform_2, window_bounds = array<i64: 1, 32, 128>}, {transform_indices = @transform_3, window_bounds = array<i64: 1, 1, 128>}, {transform_indices = @transform_4, window_bounds = array<i64: 2>}, {transform_indices = @transform_5, window_bounds = array<i64: 1, 16, 1>}, {transform_indices = @transform_6, window_bounds = array<i64: 1, 16, 1>}, {transform_indices = @transform_7, window_bounds = array<i64: 1, 16, 1>}, {transform_indices = @transform_8, window_bounds = array<i64: 1, 1, 1>}]} {
    %c0_i32 = arith.constant 0 : i32
    %0 = arith.cmpi eq, %arg1, %c0_i32 : i32
    %1 = arith.extui %0 : i1 to i32
    %c0_i32_0 = arith.constant 0 : i32
    %2 = arith.cmpi ne, %1, %c0_i32_0 : i32
    scf.if %2 {
      %cst_41 = arith.constant 0xFF800000 : f32
      %65 = vector.broadcast %cst_41 : f32 to vector<16x1xf32>
      %c0_42 = arith.constant 0 : index
      %c0_43 = arith.constant 0 : index
      %c0_44 = arith.constant 0 : index
      %66 = vector.load %arg7[%c0_42, %c0_43, %c0_44] : memref<1x16x1xf32, #tpu.memory_space<vmem>>, vector<1x16x1xf32>
      %67 = vector.shape_cast %66 : vector<1x16x1xf32> to vector<16x1xf32>
      %68 = vector.shape_cast %65 : vector<16x1xf32> to vector<1x16x1xf32>
      tpu.vector_store %arg7[%c0_42, %c0_43, %c0_44], %68 {strides = array<i32>} : memref<1x16x1xf32, #tpu.memory_space<vmem>>, vector<1x16x1xf32>,
      %cst_45 = arith.constant 0.000000e+00 : f32
      %69 = vector.broadcast %cst_45 : f32 to vector<16x1xf32>
      %c0_46 = arith.constant 0 : index
      %c0_47 = arith.constant 0 : index
      %c0_48 = arith.constant 0 : index
      %70 = vector.load %arg8[%c0_46, %c0_47, %c0_48] : memref<1x16x1xf32, #tpu.memory_space<vmem>>, vector<1x16x1xf32>
      %71 = vector.shape_cast %70 : vector<1x16x1xf32> to vector<16x1xf32>
      %72 = vector.shape_cast %69 : vector<16x1xf32> to vector<1x16x1xf32>
      tpu.vector_store %arg8[%c0_46, %c0_47, %c0_48], %72 {strides = array<i32>} : memref<1x16x1xf32, #tpu.memory_space<vmem>>, vector<1x16x1xf32>,
      %cst_49 = arith.constant 0.000000e+00 : f32
      %73 = vector.broadcast %cst_49 : f32 to vector<16x1xf32>
      %c0_50 = arith.constant 0 : index
      %c0_51 = arith.constant 0 : index
      %c0_52 = arith.constant 0 : index
      %74 = vector.load %arg9[%c0_50, %c0_51, %c0_52] : memref<1x16x1xf32, #tpu.memory_space<vmem>>, vector<1x16x1xf32>
      %75 = vector.shape_cast %74 : vector<1x16x1xf32> to vector<16x1xf32>
      %76 = vector.shape_cast %73 : vector<16x1xf32> to vector<1x16x1xf32>
      tpu.vector_store %arg9[%c0_50, %c0_51, %c0_52], %76 {strides = array<i32>} : memref<1x16x1xf32, #tpu.memory_space<vmem>>, vector<1x16x1xf32>,
    } else {
    }
    %c0_i32_1 = arith.constant 0 : i32
    %3 = arith.cmpi eq, %arg0, %c0_i32_1 : i32
    %c0_i32_2 = arith.constant 0 : i32
    %4 = arith.cmpi eq, %arg1, %c0_i32_2 : i32
    %5 = arith.andi %3, %4 : i1
    %6 = arith.extui %5 : i1 to i32
    %c0_i32_3 = arith.constant 0 : i32
    %7 = arith.cmpi ne, %6, %c0_i32_3 : i32
    scf.if %7 {
      %c0_41 = arith.constant 0 : index
      %c0_42 = arith.constant 0 : index
      %65 = vector.load %arg2[%c0_41, %c0_42] : memref<16x32xbf16, #tpu.memory_space<vmem>>, vector<8x32xbf16>
      %66 = arith.extf %65 : vector<8x32xbf16> to vector<8x32xf32>
      %c8 = arith.constant 8 : index
      %c0_43 = arith.constant 0 : index
      %67 = vector.load %arg2[%c8, %c0_43] : memref<16x32xbf16, #tpu.memory_space<vmem>>, vector<8x32xbf16>
      %68 = arith.extf %67 : vector<8x32xbf16> to vector<8x32xf32>
      %69 = arith.mulf %66, %66 : vector<8x32xf32>
      %cst_44 = arith.constant dense<0.000000e+00> : vector<8xf32>
      %70 = vector.multi_reduction <add>, %69, %cst_44 [1] : vector<8x32xf32> to vector<8xf32>
      %71 = vector.shape_cast %70 : vector<8xf32> to vector<8x1xf32>
      %cst_45 = arith.constant 1.000000e-16 : f32
      %72 = vector.broadcast %cst_45 : f32 to vector<8x1xf32>
      %73 = arith.maximumf %71, %72 : vector<8x1xf32>
      %74 = math.rsqrt %73 : vector<8x1xf32>
      %75 = arith.mulf %68, %68 : vector<8x32xf32>
      %cst_46 = arith.constant dense<0.000000e+00> : vector<8xf32>
      %76 = vector.multi_reduction <add>, %75, %cst_46 [1] : vector<8x32xf32> to vector<8xf32>
      %77 = vector.shape_cast %76 : vector<8xf32> to vector<8x1xf32>
      %cst_47 = arith.constant 1.000000e-16 : f32
      %78 = vector.broadcast %cst_47 : f32 to vector<8x1xf32>
      %79 = arith.maximumf %77, %78 : vector<8x1xf32>
      %80 = math.rsqrt %79 : vector<8x1xf32>
      %81 = vector.broadcast %74 : vector<8x1xf32> to vector<8x32xf32>
      %82 = arith.mulf %66, %81 : vector<8x32xf32>
      %83 = arith.truncf %82 : vector<8x32xf32> to vector<8x32xbf16>
      %84 = vector.broadcast %80 : vector<8x1xf32> to vector<8x32xf32>
      %85 = arith.mulf %68, %84 : vector<8x32xf32>
      %86 = arith.truncf %85 : vector<8x32xf32> to vector<8x32xbf16>
      %cst_48 = arith.constant dense<0.000000e+00> : vector<8x8xf32>
      %87 = tpu.matmul %83, %86, %cst_48 {dimension_numbers = #tpu.dot_dimension_numbers<[1], [1], [0], [0], [0, 0, 1, 0], [], []>} : vector<8x32xbf16>, vector<8x32xbf16>, vector<8x8xf32> -> vector<8x8xf32>
      %c0_49 = arith.constant 0 : index
      %88 = memref.load %arg6[%c0_49] : memref<2xf32, #tpu.memory_space<smem>>
      %89 = vector.broadcast %88 : f32 to vector<8x8xf32>
      %90 = arith.mulf %87, %89 : vector<8x8xf32>
      %c1 = arith.constant 1 : index
      %91 = memref.load %arg6[%c1] : memref<2xf32, #tpu.memory_space<smem>>
      %92 = vector.broadcast %91 : f32 to vector<8x8xf32>
      %93 = arith.addf %90, %92 : vector<8x8xf32>
      %94 = tpu.iota {dimensions = array<i32: 0>} : vector<8x8xi32>
      %95 = tpu.iota {dimensions = array<i32: 1>} : vector<8x8xi32>
      %cst_50 = arith.constant dense<0xFF800000> : vector<8xf32>
      %96 = vector.multi_reduction <maximumf>, %93, %cst_50 [1] : vector<8x8xf32> to vector<8xf32>
      %97 = vector.shape_cast %96 : vector<8xf32> to vector<8x1xf32>
      %98 = vector.broadcast %97 : vector<8x1xf32> to vector<8x8xf32>
      %99 = arith.subf %93, %98 : vector<8x8xf32>
      %100 = math.exp %99 : vector<8x8xf32>
      %cst_51 = arith.constant dense<0.000000e+00> : vector<8xf32>
      %101 = vector.multi_reduction <add>, %100, %cst_51 [1] : vector<8x8xf32> to vector<8xf32>
      %102 = vector.shape_cast %101 : vector<8xf32> to vector<8x1xf32>
      %103 = math.log %102 : vector<8x1xf32>
      %104 = arith.addf %97, %103 : vector<8x1xf32>
      %105 = arith.cmpi eq, %94, %95 : vector<8x8xi32>
      %cst_52 = arith.constant 0.000000e+00 : f32
      %106 = vector.broadcast %cst_52 : f32 to vector<8x8xf32>
      %107 = arith.select %105, %93, %106 : vector<8x8xi1>, vector<8x8xf32>
      %cst_53 = arith.constant dense<0.000000e+00> : vector<8xf32>
      %108 = vector.multi_reduction <add>, %107, %cst_53 [1] : vector<8x8xf32> to vector<8xf32>
      %109 = vector.shape_cast %108 : vector<8xf32> to vector<8x1xf32>
      %110 = arith.subf %104, %109 : vector<8x1xf32>
      %111 = vector.shape_cast %110 : vector<8x1xf32> to vector<1x8x1xf32>
      %cst_54 = arith.constant dense<0.000000e+00> : vector<1xf32>
      %112 = vector.multi_reduction <add>, %111, %cst_54 [1, 2] : vector<1x8x1xf32> to vector<1xf32>
      %113 = vector.shape_cast %112 : vector<1xf32> to vector<1x1x1xf32>
      %114 = vector.extract %113[0, 0, 0] : f32 from vector<1x1x1xf32>
      %115 = vector.broadcast %114 : f32 to vector<1x1xf32>
      %cst_55 = arith.constant 8.000000e+00 : f32
      %116 = vector.broadcast %cst_55 : f32 to vector<1x1xf32>
      %117 = arith.divf %115, %116 : vector<1x1xf32>
      %c0_56 = arith.constant 0 : index
      %c0_57 = arith.constant 0 : index
      %c0_58 = arith.constant 0 : index
      %118 = vector.load %arg10[%c0_56, %c0_57, %c0_58] : memref<1x1x1xf32, #tpu.memory_space<vmem>>, vector<1x1x1xf32>
      %119 = vector.shape_cast %118 : vector<1x1x1xf32> to vector<1x1xf32>
      %120 = vector.shape_cast %117 : vector<1x1xf32> to vector<1x1x1xf32>
      tpu.vector_store %arg10[%c0_56, %c0_57, %c0_58], %120 {strides = array<i32>} : memref<1x1x1xf32, #tpu.memory_space<vmem>>, vector<1x1x1xf32>,
    } else {
    }
    %c0_i32_4 = arith.constant 0 : i32
    %8 = arith.cmpi ne, %arg0, %c0_i32_4 : i32
    %c0_i32_5 = arith.constant 0 : i32
    %9 = arith.cmpi eq, %arg1, %c0_i32_5 : i32
    %10 = arith.andi %8, %9 : i1
    %11 = arith.extui %10 : i1 to i32
    %c0_i32_6 = arith.constant 0 : i32
    %12 = arith.cmpi ne, %11, %c0_i32_6 : i32
    scf.if %12 {
      %cst_41 = arith.constant 0.000000e+00 : f32
      %65 = vector.broadcast %cst_41 : f32 to vector<1x1xf32>
      %c0_42 = arith.constant 0 : index
      %c0_43 = arith.constant 0 : index
      %c0_44 = arith.constant 0 : index
      %66 = vector.load %arg10[%c0_42, %c0_43, %c0_44] : memref<1x1x1xf32, #tpu.memory_space<vmem>>, vector<1x1x1xf32>
      %67 = vector.shape_cast %66 : vector<1x1x1xf32> to vector<1x1xf32>
      %68 = vector.shape_cast %65 : vector<1x1xf32> to vector<1x1x1xf32>
      tpu.vector_store %arg10[%c0_42, %c0_43, %c0_44], %68 {strides = array<i32>} : memref<1x1x1xf32, #tpu.memory_space<vmem>>, vector<1x1x1xf32>,
    } else {
    }
    %c1_i32 = arith.constant 1 : i32
    %13 = arith.muli %arg0, %c1_i32 : i32
    %14 = arith.addi %13, %arg1 : i32
    %c128_i32 = arith.constant 128 : i32
    %15 = arith.muli %14, %c128_i32 : i32
    %c0 = arith.constant 0 : index
    %c0_7 = arith.constant 0 : index
    %16 = vector.load %arg2[%c0, %c0_7] : memref<16x32xbf16, #tpu.memory_space<vmem>>, vector<16x32xbf16>
    %c0_8 = arith.constant 0 : index
    %c0_9 = arith.constant 0 : index
    %c0_10 = arith.constant 0 : index
    %17 = vector.load %arg4[%c0_8, %c0_9, %c0_10] : memref<1x32x128xbf16, #tpu.memory_space<vmem>>, vector<1x32x128xbf16>
    %18 = vector.shape_cast %17 : vector<1x32x128xbf16> to vector<32x128xbf16>
    %cst = arith.constant dense<0.000000e+00> : vector<16x128xf32>
    %19 = tpu.matmul %16, %18, %cst {dimension_numbers = #tpu.dot_dimension_numbers<[1], [0], [0], [1], [0, 0, 1, 1], [], []>} : vector<16x32xbf16>, vector<32x128xbf16>, vector<16x128xf32> -> vector<16x128xf32>
    %c0_11 = arith.constant 0 : index
    %c0_12 = arith.constant 0 : index
    %c0_13 = arith.constant 0 : index
    %20 = vector.load %arg5[%c0_11, %c0_12, %c0_13] : memref<1x1x128xf32, #tpu.memory_space<vmem>>, vector<1x1x128xf32>
    %21 = vector.shape_cast %20 : vector<1x1x128xf32> to vector<1x128xf32>
    %22 = vector.broadcast %21 : vector<1x128xf32> to vector<16x128xf32>
    %23 = arith.addf %19, %22 : vector<16x128xf32>
    %24 = tpu.iota {dimensions = array<i32: 1>} : vector<1x128xi32>
    %c0_14 = arith.constant 0 : index
    %c0_15 = arith.constant 0 : index
    %25 = vector.load %arg3[%c0_14, %c0_15] : memref<16x1xi32, #tpu.memory_space<vmem>>, vector<16x1xi32>
    %26 = vector.broadcast %15 : i32 to vector<16x1xi32>
    %27 = arith.subi %25, %26 : vector<16x1xi32>
    %28 = vector.broadcast %24 : vector<1x128xi32> to vector<16x128xi32>
    %29 = vector.broadcast %27 : vector<16x1xi32> to vector<16x128xi32>
    %30 = arith.cmpi eq, %28, %29 : vector<16x128xi32>
    %c0_16 = arith.constant 0 : index
    %c0_17 = arith.constant 0 : index
    %c0_18 = arith.constant 0 : index
    %31 = vector.load %arg9[%c0_16, %c0_17, %c0_18] : memref<1x16x1xf32, #tpu.memory_space<vmem>>, vector<1x16x1xf32>
    %32 = vector.shape_cast %31 : vector<1x16x1xf32> to vector<16x1xf32>
    %cst_19 = arith.constant 0.000000e+00 : f32
    %33 = vector.broadcast %cst_19 : f32 to vector<16x128xf32>
    %34 = arith.select %30, %23, %33 : vector<16x128xi1>, vector<16x128xf32>
    %cst_20 = arith.constant dense<0.000000e+00> : vector<16xf32>
    %35 = vector.multi_reduction <add>, %34, %cst_20 [1] : vector<16x128xf32> to vector<16xf32>
    %36 = vector.shape_cast %35 : vector<16xf32> to vector<16x1xf32>
    %37 = arith.addf %32, %36 : vector<16x1xf32>
    %c0_21 = arith.constant 0 : index
    %c0_22 = arith.constant 0 : index
    %c0_23 = arith.constant 0 : index
    %38 = vector.load %arg9[%c0_21, %c0_22, %c0_23] : memref<1x16x1xf32, #tpu.memory_space<vmem>>, vector<1x16x1xf32>
    %39 = vector.shape_cast %38 : vector<1x16x1xf32> to vector<16x1xf32>
    %40 = vector.shape_cast %37 : vector<16x1xf32> to vector<1x16x1xf32>
    tpu.vector_store %arg9[%c0_21, %c0_22, %c0_23], %40 {strides = array<i32>} : memref<1x16x1xf32, #tpu.memory_space<vmem>>, vector<1x16x1xf32>,
    %cst_24 = arith.constant dense<0xFF800000> : vector<16xf32>
    %41 = vector.multi_reduction <maximumf>, %23, %cst_24 [1] : vector<16x128xf32> to vector<16xf32>
    %42 = vector.shape_cast %41 : vector<16xf32> to vector<16x1xf32>
    %c0_25 = arith.constant 0 : index
    %c0_26 = arith.constant 0 : index
    %c0_27 = arith.constant 0 : index
    %43 = vector.load %arg7[%c0_25, %c0_26, %c0_27] : memref<1x16x1xf32, #tpu.memory_space<vmem>>, vector<1x16x1xf32>
    %44 = vector.shape_cast %43 : vector<1x16x1xf32> to vector<16x1xf32>
    %45 = arith.maximumf %44, %42 : vector<16x1xf32>
    %c0_28 = arith.constant 0 : index
    %c0_29 = arith.constant 0 : index
    %c0_30 = arith.constant 0 : index
    %46 = vector.load %arg8[%c0_28, %c0_29, %c0_30] : memref<1x16x1xf32, #tpu.memory_space<vmem>>, vector<1x16x1xf32>
    %47 = vector.shape_cast %46 : vector<1x16x1xf32> to vector<16x1xf32>
    %c0_31 = arith.constant 0 : index
    %c0_32 = arith.constant 0 : index
    %c0_33 = arith.constant 0 : index
    %48 = vector.load %arg7[%c0_31, %c0_32, %c0_33] : memref<1x16x1xf32, #tpu.memory_space<vmem>>, vector<1x16x1xf32>
    %49 = vector.shape_cast %48 : vector<1x16x1xf32> to vector<16x1xf32>
    %50 = arith.subf %49, %45 : vector<16x1xf32>
    %51 = math.exp %50 : vector<16x1xf32>
    %52 = arith.mulf %47, %51 : vector<16x1xf32>
    %53 = vector.broadcast %45 : vector<16x1xf32> to vector<16x128xf32>
    %54 = arith.subf %23, %53 : vector<16x128xf32>
    %55 = math.exp %54 : vector<16x128xf32>
    %cst_34 = arith.constant dense<0.000000e+00> : vector<16xf32>
    %56 = vector.multi_reduction <add>, %55, %cst_34 [1] : vector<16x128xf32> to vector<16xf32>
    %57 = vector.shape_cast %56 : vector<16xf32> to vector<16x1xf32>
    %58 = arith.addf %52, %57 : vector<16x1xf32>
    %c0_35 = arith.constant 0 : index
    %c0_36 = arith.constant 0 : index
    %c0_37 = arith.constant 0 : index
    %59 = vector.load %arg8[%c0_35, %c0_36, %c0_37] : memref<1x16x1xf32, #tpu.memory_space<vmem>>, vector<1x16x1xf32>
    %60 = vector.shape_cast %59 : vector<1x16x1xf32> to vector<16x1xf32>
    %61 = vector.shape_cast %58 : vector<16x1xf32> to vector<1x16x1xf32>
    tpu.vector_store %arg8[%c0_35, %c0_36, %c0_37], %61 {strides = array<i32>} : memref<1x16x1xf32, #tpu.memory_space<vmem>>, vector<1x16x1xf32>,
    %c0_38 = arith.constant 0 : index
    %c0_39 = arith.constant 0 : index
    %c0_40 = arith.constant 0 : index
    %62 = vector.load %arg7[%c0_38, %c0_39, %c0_40] : memref<1x16x1xf32, #tpu.memory_space<vmem>>, vector<1x16x1xf32>
    %63 = vector.shape_cast %62 : vector<1x16x1xf32> to vector<16x1xf32>
    %64 = vector.shape_cast %45 : vector<16x1xf32> to vector<1x16x1xf32>
    tpu.vector_store %arg7[%c0_38, %c0_39, %c0_40], %64 {strides = array<i32>} : memref<1x16x1xf32, #tpu.memory_space<vmem>>, vector<1x16x1xf32>,
    return
  }
  func.func @transform_0(%arg0: i32, %arg1: i32) -> (i32, i32) {
    %c0_i32 = arith.constant 0 : i32
    %c0_i32_0 = arith.constant 0 : i32
    %c0_i32_1 = arith.constant 0 : i32
    return %c0_i32, %c0_i32_0 : i32, i32
  }
  func.func @transform_1(%arg0: i32, %arg1: i32) -> (i32, i32) {
    %c0_i32 = arith.constant 0 : i32
    %c0_i32_0 = arith.constant 0 : i32
    %c0_i32_1 = arith.constant 0 : i32
    return %c0_i32, %c0_i32_0 : i32, i32
  }
  func.func @transform_2(%arg0: i32, %arg1: i32) -> (i32, i32, i32) {
    %c1_i32 = arith.constant 1 : i32
    %0 = arith.muli %arg0, %c1_i32 : i32
    %1 = arith.addi %0, %arg1 : i32
    %c0_i32 = arith.constant 0 : i32
    %c0_i32_0 = arith.constant 0 : i32
    %c0_i32_1 = arith.constant 0 : i32
    return %1, %c0_i32, %c0_i32_0 : i32, i32, i32
  }
  func.func @transform_3(%arg0: i32, %arg1: i32) -> (i32, i32, i32) {
    %c1_i32 = arith.constant 1 : i32
    %0 = arith.muli %arg0, %c1_i32 : i32
    %1 = arith.addi %0, %arg1 : i32
    %c0_i32 = arith.constant 0 : i32
    %c0_i32_0 = arith.constant 0 : i32
    %c0_i32_1 = arith.constant 0 : i32
    return %1, %c0_i32, %c0_i32_0 : i32, i32, i32
  }
  func.func @transform_4(%arg0: i32, %arg1: i32) -> i32 {
    %c0_i32 = arith.constant 0 : i32
    %c0_i32_0 = arith.constant 0 : i32
    return %c0_i32 : i32
  }
  func.func @transform_5(%arg0: i32, %arg1: i32) -> (i32, i32, i32) {
    %c0_i32 = arith.constant 0 : i32
    %c0_i32_0 = arith.constant 0 : i32
    %c0_i32_1 = arith.constant 0 : i32
    return %arg0, %c0_i32, %c0_i32_0 : i32, i32, i32
  }
  func.func @transform_6(%arg0: i32, %arg1: i32) -> (i32, i32, i32) {
    %c0_i32 = arith.constant 0 : i32
    %c0_i32_0 = arith.constant 0 : i32
    %c0_i32_1 = arith.constant 0 : i32
    return %arg0, %c0_i32, %c0_i32_0 : i32, i32, i32
  }
  func.func @transform_7(%arg0: i32, %arg1: i32) -> (i32, i32, i32) {
    %c0_i32 = arith.constant 0 : i32
    %c0_i32_0 = arith.constant 0 : i32
    %c0_i32_1 = arith.constant 0 : i32
    return %arg0, %c0_i32, %c0_i32_0 : i32, i32, i32
  }
  func.func @transform_8(%arg0: i32, %arg1: i32) -> (i32, i32, i32) {
    %c0_i32 = arith.constant 0 : i32
    %c0_i32_0 = arith.constant 0 : i32
    %c0_i32_1 = arith.constant 0 : i32
    return %arg0, %c0_i32, %c0_i32_0 : i32, i32, i32
  }
}

</mosaic_0001>

<llo_original>
// kernel: softmaxproto_forward.1
$region0: #{softmaxproto_forward.1}
  #allocation0 [shape = 'u32[]', space=smem, size = 0x4, offset = 0x4, fixed_abs, tag = 'smem constant byte address 0x4 - core index']
  #allocation1 [shape = 'u32[144,128]{1,0:T(1,128)}', space=vmem, size = 0x12000, scoped, tag = 'internal scratch']
  %s0 = inlined_call_operand.vmem [shape: bf16[16,32], index: 0, kind: input, shape index: {}]
  %s1 = inlined_call_operand.vmem [shape: s32[16,1], index: 1, kind: input, shape index: {}]
  %s2 = inlined_call_operand.vmem [shape: bf16[1,32,128], index: 2, kind: input, shape index: {}]
  %s3 = inlined_call_operand.vmem [shape: f32[1,1,128], index: 3, kind: input, shape index: {}]
  %s4 = inlined_call_operand.vmem [shape: f32[2], index: 4, kind: input, shape index: {}]
  %s5 = inlined_call_operand.vmem [shape: f32[1,16,1], index: 5, kind: output, shape index: {0}]
  %s6 = inlined_call_operand.vmem [shape: f32[1,16,1], index: 6, kind: output, shape index: {1}]
  %s7 = inlined_call_operand.vmem [shape: f32[1,16,1], index: 7, kind: output, shape index: {2}]
  %s8 = inlined_call_operand.hbm [shape: f32[1,1,1], index: 8, kind: output, shape index: {3}]
  %9 = xla_tuple %s5, %s6, %s7, %s8
  %s10 = sld [smem:[#allocation0]]
  $region70: #{softmaxproto_forward.1} parent=0
    _
  %s12 = ssub.s32 1, %s10
  %s13 = scalar_select 0, %s12, %s10
  $region1: #{softmaxproto_forward.1} parent=0
    #allocation2 [shape = 'u8[512]{0}', space=smem, size = 0x200, scoped, tag = 'input window, operand 4, single buffered']
    #allocation3 [shape = 's32[1]{0}', space=sflag, size = 0x4, scoped, tag = 'scoped memory for softmaxproto_forward.1']
    #allocation4 [shape = 's32[1]{0}', space=sflag, size = 0x4, scoped, tag = 'scoped memory for softmaxproto_forward.1']
    #allocation5 [shape = 'u8[512]{0}', space=vmem, size = 0x400, scoped, tag = 'output window, operand 3, single buffered']
    %14 = vsyncpa [#allocation4], 0
    %15 = vsyncpa [#allocation3], 0
    // Predicated region
    $region2: #{softmaxproto_forward.1} parent=1 // pred_check
      _
    $region3: #{softmaxproto_forward.1} parent=1 // pred_check_branch
      %17 = sbr.rel (0) target = $region5
    $region4: #{softmaxproto_forward.1} parent=1 // pred_region
      _
    $region5: #{softmaxproto_forward.1} parent=1 // pred_fallthru
      _
    // Predicated region
    $region6: #{softmaxproto_forward.1} parent=1 // pred_check
      _
    $region7: #{softmaxproto_forward.1} parent=1 // pred_check_branch
      %19 = sbr.rel (0) target = $region9
    $region8: #{softmaxproto_forward.1} parent=1 // pred_region
      _
    $region9: #{softmaxproto_forward.1} parent=1 // pred_fallthru
      _
    // Predicated region
    $region10: #{softmaxproto_forward.1} parent=1 // pred_check
      _
    $region11: #{softmaxproto_forward.1} parent=1 // pred_check_branch
      %21 = sbr.rel (0) target = $region13
    $region12: #{softmaxproto_forward.1} parent=1 // pred_region
      %s22 = sadd.s32 0, 0
      %p23 = scmp.lt.s32.totalorder %s22, 0
      %s24 = scalar_select %p23, %s22, 0
      %s25 = smul.addr %s24, 4
      %s26 = smul.addr %s25, 4
      %s27 = scalar_lea.vmem %s2, %s26
      %s28 = sadd.s32 0, 0
    $region13: #{softmaxproto_forward.1} parent=1 // pred_fallthru
      _
    // Predicated region
    $region14: #{softmaxproto_forward.1} parent=1 // pred_check
      _
    $region15: #{softmaxproto_forward.1} parent=1 // pred_check_branch
      %30 = sbr.rel (0) target = $region17
    $region16: #{softmaxproto_forward.1} parent=1 // pred_region
      %s31 = sadd.s32 0, 0
      %p32 = scmp.lt.s32.totalorder %s31, 0
      %s33 = scalar_select %p32, %s31, 0
      %s34 = scalar_lea.vmem %s3, %s33
      %s35 = sadd.s32 0, 0
    $region17: #{softmaxproto_forward.1} parent=1 // pred_fallthru
      _
    // Predicated region
    $region18: #{softmaxproto_forward.1} parent=1 // pred_check
      _
    $region19: #{softmaxproto_forward.1} parent=1 // pred_check_branch
      %37 = sbr.rel (0) target = $region21
    $region20: #{softmaxproto_forward.1} parent=1 // pred_region
      %s39 = ssub.s32 16, 16
      %40 = vsyncadd [#allocation4], %s39
      %s42 = sshll.u32 %s4, 4
      %s43 = int_to_ptr.vmem [resolvable:$true] %s42
      %45 = dma.vmem_to_smem %s43, 16, [#allocation2], [#allocation4]
    $region21: #{softmaxproto_forward.1} parent=1 // pred_fallthru
      _
    // Predicated region
    $region22: #{softmaxproto_forward.1} parent=1 // pred_check
      _
    $region23: #{softmaxproto_forward.1} parent=1 // pred_check_branch
      %47 = sbr.rel (0) target = $region25
    $region24: #{softmaxproto_forward.1} parent=1 // pred_region
      %48 = dma.done [#allocation4], 16
    $region25: #{softmaxproto_forward.1} parent=1 // pred_fallthru
      _
    %49 = sfence
    %s50 = sadd.s32 0, 0
    %p51 = scmp.lt.s32.totalorder %s50, 0
    %s52 = scalar_select %p51, %s50, 0
    %s53 = smul.addr %s52, 4
    %s54 = smul.addr %s53, 4
    %s55 = scalar_lea.vmem %s2, %s54
    %s56 = sadd.s32 0, 0
    %p57 = scmp.lt.s32.totalorder %s56, 0
    %s58 = scalar_select %p57, %s56, 0
    %s59 = scalar_lea.vmem %s3, %s58
    %s60 = sadd.s32 0, 0
    %p61 = scmp.lt.s32.totalorder %s60, 0
    %s62 = scalar_select %p61, %s60, 0
    %s63 = smul.addr %s62, 4
    %s64 = smul.addr %s63, 4
    %s65 = scalar_lea.vmem %s2, %s64
    %s66 = sadd.s32 0, 0
    %s67 = sadd.s32 0, 0
    %p68 = scmp.lt.s32.totalorder %s67, 0
    %s69 = scalar_select %p68, %s67, 0
    %s70 = scalar_lea.vmem %s3, %s69
    %s71 = sadd.s32 0, 0
    %p73 = scmp.eq.s32.totalorder 0, 0
    // Predicated region
    $region26: #{softmaxproto_forward.1} parent=1 // pred_check
      %p74 = pneg %p73
    $region27: #{softmaxproto_forward.1} parent=1 // pred_check_branch
      %76 = sbr.rel (%p74) target = $region29
    $region28: #{softmaxproto_forward.1} parent=1 // pred_region
      %vm77 = vcmask 7168
      %78 = vst.msk [vmem:[%s5] sm:$0xff] %vm77, -inf
      %79 = vst.msk [vmem:[%s5 + $0x8] sm:$0xff] %vm77, -inf
      %80 = vst.msk [vmem:[%s6] sm:$0xff] %vm77, 0.0
      %81 = vst.msk [vmem:[%s6 + $0x8] sm:$0xff] %vm77, 0.0
      %82 = vst.msk [vmem:[%s7] sm:$0xff] %vm77, 0.0
      %83 = vst.msk [vmem:[%s7 + $0x8] sm:$0xff] %vm77, 0.0
    $region29: #{softmaxproto_forward.1} parent=1 // pred_fallthru
      _
    %p84 = scmp.eq.s32.totalorder 0, 0
    %p85 = pnand %p84, %p73
    %p86 = pneg %p85
    // Predicated region
    $region30: #{softmaxproto_forward.1} parent=1 // pred_check
      _
    $region31: #{softmaxproto_forward.1} parent=1 // pred_check_branch
      %88 = sbr.rel (%p85) target = $region33
    $region32: #{softmaxproto_forward.1} parent=1 // pred_region
      %v89 = vld [vmem:[%s0] sm:$0xf]
      %v90 = vunpack.c.l.bf16 %v89
      %v91 = vld [vmem:[%s0 + $0x4] sm:$0xf]
      %v92 = vunpack.c.l.bf16 %v91
      %v93 = vmul.f32 %v90, %v90
      %vm94 = vcmask 261120
      %v95 = vsel %vm94, %v93, 0.0
      %96 = vadd.xlane.f32.xlu0 %v95
      %v97 = vpop.xlane.xlu0 %96
      %v98 = vmax.f32 %v97, 1e-16
      %v99 = vrsqrt.pop %v98
      %v100 = vmul.f32 %v92, %v92
      %v101 = vsel %vm94, %v100, 0.0
      %102 = vadd.xlane.f32.xlu0 %v101
      %v103 = vpop.xlane.xlu0 %102
      %v104 = vmax.f32 %v103, 1e-16
      %v105 = vrsqrt.pop %v104
      %v106 = vmul.f32 %v90, %v99
      %v107 = vpack.c.bf16 %v106, %v106
      %v108 = vmul.f32 %v92, %v105
      %v109 = vpack.c.bf16 %v108, %v108
      %v111 = vsel %vm94, %v107, 0
      %v114 = vsel %vm94, %v109, 0
      %116 = vmatprep.subr.bf16.mxu0 0
      %117 = vmatpush1.bf16.xpose.msra.mxu0 %v114
      %118 = vmatprep.subr.bf16.mxu0 0
      %119 = vmatpush1.bf16.xpose.msra.mxu0 0
      %120 = vmatprep.subr.bf16.mxu0 0
      %121 = vmatpush1.bf16.xpose.msra.mxu0 0
      %122 = vmatprep.subr.bf16.mxu0 0
      %123 = vmatpush1.bf16.xpose.msra.mxu0 0
      %124 = vmatprep.subr.bf16.mxu0 0
      %125 = vmatpush1.bf16.xpose.msra.mxu0 0
      %126 = vmatprep.subr.bf16.mxu0 0
      %127 = vmatpush1.bf16.xpose.msra.mxu0 0
      %128 = vmatprep.subr.bf16.mxu0 0
      %129 = vmatpush1.bf16.xpose.msra.mxu0 0
      %130 = vmatprep.subr.bf16.mxu0 0
      %131 = vmatpush1.bf16.xpose.msra.mxu0 0
      %132 = vmatprep.subr.bf16.mxu0 0
      %133 = vmatpush1.bf16.xpose.msra.mxu0 0
      %134 = vmatprep.subr.bf16.mxu0 0
      %135 = vmatpush1.bf16.xpose.msra.mxu0 0
      %136 = vmatprep.subr.bf16.mxu0 0
      %137 = vmatpush1.bf16.xpose.msra.mxu0 0
      %138 = vmatprep.subr.bf16.mxu0 0
      %139 = vmatpush1.bf16.xpose.msra.mxu0 0
      %140 = vmatprep.subr.bf16.mxu0 0
      %141 = vmatpush1.bf16.xpose.msra.mxu0 0
      %142 = vmatprep.subr.bf16.mxu0 0
      %143 = vmatpush1.bf16.xpose.msra.mxu0 0
      %144 = vmatprep.subr.bf16.mxu0 0
      %145 = vmatpush1.bf16.xpose.msra.mxu0 0
      %146 = vmatprep.subr.bf16.mxu0 0
      %147 = vmatpush1.bf16.xpose.msra.mxu0 0
      %148 = vmatprep.mubr.bf16.mxu0 0
      %149 = vmatmul.mubr.bf16.gmra.mrb[0].mxu0 %v111
      %v150 = vpop.f32.mrb[0].mxu0
      %v151 = vadd.f32 0.0, %v150
      %v152 = vpop.f32.mrb[0].mxu0
      %v153 = vpop.f32.mrb[0].mxu0
      %v154 = vpop.f32.mrb[0].mxu0
      %155 = vdwg.mxu0
      %s156 = sld [smem:[#allocation2]]
      %v157 = vstv %s156
      %v158 = vmul.f32 %v151, %v157
      %s159 = sld [smem:[#allocation2 + $0x1]]
      %v160 = vstv %s159
      %v161 = vadd.f32 %v158, %v160
      %v162 = vlaneseq
      %v163 = vshrl.u32 %v162, 7
      %v164 = vlaneseq
      %v165 = vand.u32 %v164, 127
      %vm166 = vcmask 64512
      %v167 = vsel %vm166, %v161, -inf
      %168 = vmax.xlane.f32.xlu0 %v167
      %v169 = vpop.xlane.xlu0 %168
      %v170 = vsub.f32 %v161, %v169
      %v171 = vmul.f32 %v170, 1.442695
      %v172 = vpow.pop %v171
      %v173 = vsel %vm166, %v172, 0.0
      %174 = vadd.xlane.f32.xlu0 %v173
      %v175 = vpop.xlane.xlu0 %174
      %v176 = vlog2.pop %v175
      %v177 = vmul.f32 %v176, 0.6931472
      %v178 = vadd.f32 %v169, %v177
      %vm179 = vcmp.eq.s32.totalorder %v163, %v165
      %v180 = vsel %vm179, %v161, 0.0
      %v181 = vsel %vm166, %v180, 0.0
      %182 = vadd.xlane.f32.xlu0 %v181
      %v183 = vpop.xlane.xlu0 %182
      %v184 = vsub.f32 %v178, %v183
      %vm185 = vcmask 7168
      %v186 = vsel %vm185, %v184, 0.0
      %187 = vadd.xlane.f32.xlu0 %v186
      %v188 = vpop.xlane.xlu0 %187
      %v189 = vrot.slane %v188, 4
      %v190 = vadd.f32 %v188, %v189
      %v191 = vrot.slane %v190, 2
      %v192 = vadd.f32 %v190, %v191
      %v193 = vrot.slane %v192, 1
      %v194 = vadd.f32 %v192, %v193
      %s195 = vtos %v194
      %v196 = vstv %s195
      %v197 = vrcp.pop 8.0
      %v198 = vmul.f32 %v196, %v197
      %vm199 = vcmask 0
      %200 = vst.msk [vmem:[#allocation5] sm:$0x1] %vm199, %v198
    $region33: #{softmaxproto_forward.1} parent=1 // pred_fallthru
      _
    %p201 = scmp.ne.s32.totalorder 0, 0
    %p202 = pnand %p201, %p73
    %p203 = pneg %p202
    // Predicated region
    $region34: #{softmaxproto_forward.1} parent=1 // pred_check
      _
    $region35: #{softmaxproto_forward.1} parent=1 // pred_check_branch
      %205 = sbr.rel (%p202) target = $region37
    $region36: #{softmaxproto_forward.1} parent=1 // pred_region
      %vm206 = vcmask 0
      %207 = vst.msk [vmem:[#allocation5] sm:$0x1] %vm206, 0.0
    $region37: #{softmaxproto_forward.1} parent=1 // pred_fallthru
      _
    %s208 = sadd.s32 0, 0
    %s209 = smul.u32 %s208, 128
    %v210 = vld [vmem:[%s0] sm:$0xf]
    %v211 = vld [vmem:[%s0 + $0x4] sm:$0xf]
    %v212 = vld [vmem:[%s65] sm:$0xf]
    %v213 = vld [vmem:[%s65 + $0x4] sm:$0xf]
    %v214 = vld [vmem:[%s65 + $0x8] sm:$0xf]
    %v215 = vld [vmem:[%s65 + $0xc] sm:$0xf]
    %v216 = vld [vmem:[%s70] sm:$0x1]
    %v218 = vlaneseq
    %v219 = vshrl.u32 %v218, 7
    %v220 = vsub.s32 0, %v219
    %v221 = vrot.slane %v216, %v220
    %v225 = vunpack.c.l.b16 %v210
    %v226 = vunpack.c.l.b16 %v211
    %v227 = vpack.c.b16 %v226, %v225
    %v232 = vunpack.c.l.b16 %v212
    %v233 = vunpack.c.l.b16 %v213
    %v234 = vunpack.c.l.b16 %v214
    %v235 = vunpack.c.l.b16 %v215
    %v236 = vpack.c.b16 %v233, %v232
    %v237 = vpack.c.b16 %v235, %v234
    %vm240 = vcmask 261120
    %v242 = vsel %vm240, %v227, 0
    %244 = vmatprep.subr.bf16.mxu0 0
    %245 = vmatpush1.bf16.msra.mxu0 %v236
    %246 = vmatprep.subr.bf16.mxu0 0
    %247 = vmatpush1.bf16.msra.mxu0 %v237
    %248 = vmatprep.subr.bf16.mxu0 0
    %249 = vmatpush1.bf16.msra.mxu0 0
    %250 = vmatprep.subr.bf16.mxu0 0
    %251 = vmatpush1.bf16.msra.mxu0 0
    %252 = vmatprep.subr.bf16.mxu0 0
    %253 = vmatpush1.bf16.msra.mxu0 0
    %254 = vmatprep.subr.bf16.mxu0 0
    %255 = vmatpush1.bf16.msra.mxu0 0
    %256 = vmatprep.subr.bf16.mxu0 0
    %257 = vmatpush1.bf16.msra.mxu0 0
    %258 = vmatprep.subr.bf16.mxu0 0
    %259 = vmatpush1.bf16.msra.mxu0 0
    %260 = vmatprep.subr.bf16.mxu0 0
    %261 = vmatpush1.bf16.msra.mxu0 0
    %262 = vmatprep.subr.bf16.mxu0 0
    %263 = vmatpush1.bf16.msra.mxu0 0
    %264 = vmatprep.subr.bf16.mxu0 0
    %265 = vmatpush1.bf16.msra.mxu0 0
    %266 = vmatprep.subr.bf16.mxu0 0
    %267 = vmatpush1.bf16.msra.mxu0 0
    %268 = vmatprep.subr.bf16.mxu0 0
    %269 = vmatpush1.bf16.msra.mxu0 0
    %270 = vmatprep.subr.bf16.mxu0 0
    %271 = vmatpush1.bf16.msra.mxu0 0
    %272 = vmatprep.subr.bf16.mxu0 0
    %273 = vmatpush1.bf16.msra.mxu0 0
    %274 = vmatprep.subr.bf16.mxu0 0
    %275 = vmatpush1.bf16.msra.mxu0 0
    %276 = vmatprep.mubr.bf16.mxu0 0
    %277 = vmatmul.mubr.bf16.gmra.mrb[0].mxu0 %v242
    %v278 = vpop.f32.mrb[0].mxu0
    %v279 = vadd.f32 %v221, %v278
    %v280 = vpop.f32.mrb[0].mxu0
    %v281 = vpop.f32.mrb[0].mxu0
    %v282 = vadd.f32 %v221, %v281
    %v283 = vpop.f32.mrb[0].mxu0
    %284 = vdwg.mxu0
    %v285 = vlaneseq
    %v286 = vand.u32 %v285, 127
    %v287 = vld [vmem:[%s1] sm:$0xff]
    %v288 = vld [vmem:[%s1 + $0x8] sm:$0xff]
    %v289 = vstv %s209
    %v290 = vsub.s32 %v287, %v289
    %v291 = vsub.s32 %v288, %v289
    %292 = vset.pattern.permute.xlu0 0
    %293 = vperm.xlu0 %292, %v290
    %v294 = vpop.permute.xlu0 %293
    %295 = vset.pattern.permute.xlu0 0
    %296 = vperm.xlu0 %295, %v291
    %v297 = vpop.permute.xlu0 %296
    %vm298 = vcmp.eq.s32.totalorder %v286, %v294
    %vm299 = vcmp.eq.s32.totalorder %v286, %v297
    %v300 = vld [vmem:[%s7] sm:$0xff]
    %v301 = vld [vmem:[%s7 + $0x8] sm:$0xff]
    %v302 = vsel %vm298, %v279, 0.0
    %v303 = vsel %vm299, %v282, 0.0
    %304 = vadd.xlane.f32.xlu0 %v302
    %v305 = vpop.xlane.xlu0 %304
    %306 = vadd.xlane.f32.xlu0 %v303
    %v307 = vpop.xlane.xlu0 %306
    %v308 = vadd.f32 %v300, %v305
    %v309 = vadd.f32 %v301, %v307
    %vm310 = vcmask 7168
    %311 = vst.msk [vmem:[%s7] sm:$0xff] %vm310, %v308
    %312 = vst.msk [vmem:[%s7 + $0x8] sm:$0xff] %vm310, %v309
    %313 = vmax.xlane.f32.xlu0 %v279
    %v314 = vpop.xlane.xlu0 %313
    %315 = vmax.xlane.f32.xlu0 %v282
    %v316 = vpop.xlane.xlu0 %315
    %v317 = vld [vmem:[%s5] sm:$0xff]
    %v318 = vld [vmem:[%s5 + $0x8] sm:$0xff]
    %v319 = vmax.f32 %v317, %v314
    %v320 = vmax.f32 %v318, %v316
    %v321 = vld [vmem:[%s6] sm:$0xff]
    %v322 = vld [vmem:[%s6 + $0x8] sm:$0xff]
    %v323 = vsub.f32 %v317, %v319
    %v324 = vsub.f32 %v318, %v320
    %v325 = vmul.f32 %v323, 1.442695
    %v326 = vpow.pop %v325
    %v327 = vmul.f32 %v324, 1.442695
    %v328 = vpow.pop %v327
    %v329 = vmul.f32 %v321, %v326
    %v330 = vmul.f32 %v322, %v328
    %332 = vset.pattern.permute.xlu0 0
    %333 = vperm.xlu0 %332, %v319
    %v334 = vpop.permute.xlu0 %333
    %337 = vset.pattern.permute.xlu0 0
    %338 = vperm.xlu0 %337, %v320
    %v339 = vpop.permute.xlu0 %338
    %v341 = vsub.f32 %v279, %v334
    %v342 = vsub.f32 %v282, %v339
    %v343 = vmul.f32 %v341, 1.442695
    %v344 = vpow.pop %v343
    %v345 = vmul.f32 %v342, 1.442695
    %v346 = vpow.pop %v345
    %347 = vadd.xlane.f32.xlu0 %v344
    %v348 = vpop.xlane.xlu0 %347
    %349 = vadd.xlane.f32.xlu0 %v346
    %v350 = vpop.xlane.xlu0 %349
    %v351 = vadd.f32 %v329, %v348
    %v352 = vadd.f32 %v330, %v350
    %353 = vst.msk [vmem:[%s6] sm:$0xff] %vm310, %v351
    %354 = vst.msk [vmem:[%s6 + $0x8] sm:$0xff] %vm310, %v352
    %355 = vst.msk [vmem:[%s5] sm:$0xff] %vm310, %v319
    %356 = vst.msk [vmem:[%s5 + $0x8] sm:$0xff] %vm310, %v320
    // Predicated region
    $region38: #{softmaxproto_forward.1} parent=1 // pred_check
      _
    $region39: #{softmaxproto_forward.1} parent=1 // pred_check_branch
      %358 = sbr.rel (0) target = $region41
    $region40: #{softmaxproto_forward.1} parent=1 // pred_region
      _
    $region41: #{softmaxproto_forward.1} parent=1 // pred_fallthru
      _
    // Predicated region
    $region42: #{softmaxproto_forward.1} parent=1 // pred_check
      _
    $region43: #{softmaxproto_forward.1} parent=1 // pred_check_branch
      %360 = sbr.rel (0) target = $region45
    $region44: #{softmaxproto_forward.1} parent=1 // pred_region
      _
    $region45: #{softmaxproto_forward.1} parent=1 // pred_fallthru
      _
    // Predicated region
    $region46: #{softmaxproto_forward.1} parent=1 // pred_check
      _
    $region47: #{softmaxproto_forward.1} parent=1 // pred_check_branch
      %362 = sbr.rel (0) target = $region49
    $region48: #{softmaxproto_forward.1} parent=1 // pred_region
      _
    $region49: #{softmaxproto_forward.1} parent=1 // pred_fallthru
      _
    // Predicated region
    $region50: #{softmaxproto_forward.1} parent=1 // pred_check
      _
    $region51: #{softmaxproto_forward.1} parent=1 // pred_check_branch
      %364 = sbr.rel (0) target = $region53
    $region52: #{softmaxproto_forward.1} parent=1 // pred_region
      %s366 = ssub.s32 16, 16
      %367 = vsyncadd [#allocation3], %s366
      %s369 = sshll.u32 [#allocation5], 4
      %s370 = int_to_ptr.vmem [resolvable:$true] %s369
      %372 = dma.vmem_to_hbm [thread:$0]  %s370, 16, %s8, [#allocation3]
    $region53: #{softmaxproto_forward.1} parent=1 // pred_fallthru
      _
    // Predicated region
    $region54: #{softmaxproto_forward.1} parent=1 // pred_check
      _
    $region55: #{softmaxproto_forward.1} parent=1 // pred_check_branch
      %374 = sbr.rel (0) target = $region57
    $region56: #{softmaxproto_forward.1} parent=1 // pred_region
      _
    $region57: #{softmaxproto_forward.1} parent=1 // pred_fallthru
      _
    // Predicated region
    $region58: #{softmaxproto_forward.1} parent=1 // pred_check
      _
    $region59: #{softmaxproto_forward.1} parent=1 // pred_check_branch
      %376 = sbr.rel (0) target = $region61
    $region60: #{softmaxproto_forward.1} parent=1 // pred_region
      _
    $region61: #{softmaxproto_forward.1} parent=1 // pred_fallthru
      _
    // Predicated region
    $region62: #{softmaxproto_forward.1} parent=1 // pred_check
      _
    $region63: #{softmaxproto_forward.1} parent=1 // pred_check_branch
      %378 = sbr.rel (0) target = $region65
    $region64: #{softmaxproto_forward.1} parent=1 // pred_region
      _
    $region65: #{softmaxproto_forward.1} parent=1 // pred_fallthru
      _
    // Predicated region
    $region66: #{softmaxproto_forward.1} parent=1 // pred_check
      _
    $region67: #{softmaxproto_forward.1} parent=1 // pred_check_branch
      %380 = sbr.rel (0) target = $region69
    $region68: #{softmaxproto_forward.1} parent=1 // pred_region
      %381 = dma.done [#allocation3], 16
    $region69: #{softmaxproto_forward.1} parent=1 // pred_fallthru
      _
    %382 = vsyncpa [#allocation3], 1
    %383 = vsyncpa [#allocation4], 1

</llo_original>
